<compile_context>
chip_gen: v6e
topology: v6e:2x2x1
jax: 0.10.0
libtpu: 0.0.40
codegen_flags: <defaults>
</compile_context>

<pallas_src>
import math

import jax
import jax.numpy as jnp
import numpy as np
from jax.experimental import pallas as pl
from jax.experimental.pallas import tpu as pltpu


# ----------------------------------------------------------------------------
# Pallas kernel: fused circular conv + temporal lookup + positional/bias add
# ----------------------------------------------------------------------------
def data_embedding_kernel(x_ref, ids_ref, w_ref, add_ref, o_ref):
    TB, S, C = x_ref.shape
    D = o_ref.shape[-1]
    K = w_ref.shape[0]          # T + 3C
    T = K - 3 * C

    # --- circular conv taps: x[(t-1) mod S], x[(t+1) mod S] via XLU sublane rotate ---
    x = x_ref[...]                                   # (TB, S, C)
    x_prev = pltpu.roll(x, 1, axis=1)                # x[t-1]
    x_next = pltpu.roll(x, S - 1, axis=1)            # x[t+1]  (non-negative shift == -1)

    # --- temporal multi-hot from packed calendar ids (4 x 8-bit fields per int32) ---
    ids = ids_ref[...].reshape(TB * S, 1)            # packed, already offset into table rows
    col = jax.lax.broadcasted_iota(jnp.int32, (1, T), 1)
    hot = (ids & 0xFF) == col
    hot = hot | (((ids >> 8) & 0xFF) == col)
    hot = hot | (((ids >> 16) & 0xFF) == col)
    hot = hot | (((ids >> 24) & 0xFF) == col)
    multihot = hot.astype(jnp.float32)               # fields disjoint -> OR == sum

    # --- single fused MXU dot: [multihot | x_prev | x | x_next] @ [Ttab ; W0 ; W1 ; W2] ---
    lhs = jnp.concatenate(
        [multihot,
         x_prev.reshape(TB * S, C),
         x.reshape(TB * S, C),
         x_next.reshape(TB * S, C)], axis=-1)        # (TB*S, T + 3C)
    y = jnp.dot(lhs, w_ref[...], preferred_element_type=jnp.float32)   # (TB*S, D)

    # --- add pre-folded (positional + conv-bias) table and store (lane-dense D) ---
    o_ref[...] = (y.reshape(TB, S, D) + add_ref[...][None]).astype(o_ref.dtype)


# ----------------------------------------------------------------------------
# Batch-tile chooser with realistic VMEM accounting
# ----------------------------------------------------------------------------
def _round_up(v, m):
    return -(-v // m) * m


def _pick_batch_block(B, S, C, D, T, out_itemsize=4, budget_bytes=20 << 20):
    """Largest batch tile (dividing B) whose true VMEM footprint fits the budget.

    Accounts for (8,128) padding of every VMEM block (x / ids blocks with tiny last
    dims inflate ~32x vs HBM), the 2x double-buffering Pallas applies to every
    streamed BlockSpec, and the f32 intermediates built inside the kernel.
    Also capped at B//2 so the grid has >= 2 steps (both v7x TensorCores get work).
    """
    s_pad = _round_up(S, 8)
    c_pad = _round_up(C, 128)
    d_pad = _round_up(D, 128)
    k_pad = _round_up(3 * C + T, 128)

    def footprint(tb):
        rows = _round_up(tb * S, 8)
        x_blk = tb * s_pad * c_pad * 4
        ids_blk = tb * s_pad * 128 * 4                # packed ids, last dim 1 -> 128 lanes
        out_blk = tb * s_pad * d_pad * out_itemsize
        streamed = 2 * (x_blk + ids_blk + out_blk)    # double buffered
        const = 2 * (k_pad * d_pad + s_pad * d_pad) * 4   # fused W + (pos+bias) table
        inter = (2 * tb * s_pad * c_pad               # x_prev, x_next
                 + rows * k_pad                       # lhs concat
                 + rows * _round_up(T, 128)           # multihot
                 + 2 * rows * d_pad) * 4              # dot result + pre-store sum
        return streamed + const + inter

    tb = B // 2 if B >= 2 else 1                      # megacore: grid >= 2 steps on v7x
    tb = max(tb, 1)
    while tb > 1 and footprint(tb) > budget_bytes:
        tb -= 1
    while B % tb:
        tb -= 1
    return tb


# ----------------------------------------------------------------------------
# Wrapper
# ----------------------------------------------------------------------------
def data_embedding_forward(x, packed_ids, conv_w, conv_b, pos_tab, temp_tab,
                           batch_block=None, out_dtype=jnp.float32,
                           vmem_limit_bytes=32 << 20):
    """
    x:          (B, S, C)  float32
    packed_ids: (B, S, 1)  int32, four 8-bit fields (already offset into temp_tab rows)
    conv_w:     (D, C, 3)  Conv1d weight
    conv_b:     (D,)       Conv1d bias
    pos_tab:    (S, D)     positional sinusoid table (already sliced to S)
    temp_tab:   (T, D)     concatenated (zero-padded) month/day/weekday/hour tables
    out_dtype:  float32 (module semantics); bfloat16 halves the dominant HBM write stream.
    vmem_limit_bytes: 32 MiB is safe on v5e/v6e/v7x; on v6e/v5e it can be raised to
                      64-96 MiB together with a larger batch_block (128 MiB physical VMEM).
    """
    B, S, C = x.shape
    D = conv_w.shape[0]
    T = temp_tab.shape[0]

    # Fused RHS: row layout matches the kernel LHS concat [multihot | x_prev | x | x_next].
    w_fused = jnp.concatenate(
        [temp_tab,
         jnp.transpose(conv_w[:, :, 0]),
         jnp.transpose(conv_w[:, :, 1]),
         jnp.transpose(conv_w[:, :, 2])], axis=0)            # (T + 3C, D)
    # Fold conv bias into the positional table (single additive constant).
    add_tab = pos_tab + conv_b[None, :]                      # (S, D)

    out_itemsize = jnp.dtype(out_dtype).itemsize
    TB = batch_block if batch_block is not None else _pick_batch_block(
        B, S, C, D, T, out_itemsize)
    assert B % TB == 0, "batch_block must divide batch size"
    # NOTE: blocks carry the full sequence S; the circular conv would be wrong if S were tiled.
    grid = (B // TB,)

    return pl.pallas_call(
        data_embedding_kernel,
        out_shape=jax.ShapeDtypeStruct((B, S, D), out_dtype),
        grid_spec=pltpu.PrefetchScalarGridSpec(
            num_scalar_prefetch=0,
            grid=grid,
            in_specs=[
                pl.BlockSpec((TB, S, C), lambda b: (b, 0, 0)),      # x (TB batches, full S)
                pl.BlockSpec((TB, S, 1), lambda b: (b, 0, 0)),      # packed calendar ids
                pl.BlockSpec((T + 3 * C, D), lambda b: (0, 0)),     # fused temporal+conv RHS
                pl.BlockSpec((S, D), lambda b: (0, 0)),             # pos + bias table
            ],
            out_specs=pl.BlockSpec((TB, S, D), lambda b: (b, 0, 0)),
        ),
        compiler_params=pltpu.CompilerParams(
            dimension_semantics=("parallel",),
            vmem_limit_bytes=vmem_limit_bytes,
        ),
    )(x, packed_ids, w_fused, add_tab)


# ----------------------------------------------------------------------------
# Glue: fixed sinusoid tables, concatenated temporal table, id packing, reference
# ----------------------------------------------------------------------------
def sinusoid_table(n, d):
    pos = jnp.arange(n, dtype=jnp.float32)[:, None]
    div = jnp.exp(jnp.arange(0, d, 2, dtype=jnp.float32) * -(math.log(10000.0) / d))
    tab = jnp.zeros((n, d), jnp.float32)
    tab = tab.at[:, 0::2].set(jnp.sin(pos * div))
    tab = tab.at[:, 1::2].set(jnp.cos(pos * div))
    return tab


def build_temporal_table(d_model, pad_rows=128):
    """Concatenated fixed tables (month|day|weekday|hour) + per-field row offsets."""
    sizes = [13, 32, 7, 24]                          # month, day, weekday, hour
    tabs = [sinusoid_table(n, d_model) for n in sizes]
    offsets = np.concatenate([[0], np.cumsum(sizes)[:-1]]).astype(np.int32)  # [0,13,45,52]
    cat = jnp.concatenate(tabs, axis=0)              # (76, D)
    total = int(sum(sizes))
    pad_to = max(pad_rows, ((total + 7) // 8) * 8)
    cat = jnp.pad(cat, ((0, pad_to - total), (0, 0)))
    return cat, jnp.asarray(offsets, jnp.int32)


def pack_mark_indices(x_mark, offsets):
    """(B,S,4) calendar indices -> (B,S,1) int32 with four 8-bit offset fields."""
    ids = x_mark.astype(jnp.int32) + offsets[None, None, :]   # all fields < 76 < 2**8
    packed = (ids[..., 0] | (ids[..., 1] << 8) | (ids[..., 2] << 16) | (ids[..., 3] << 24))
    return packed[..., None].astype(jnp.int32)


def ref_forward(x, conv_w, conv_b, pos_tab, temp_emb):
    x_prev = jnp.roll(x, 1, axis=1)
    x_next = jnp.roll(x, -1, axis=1)
    conv = (
        jnp.einsum("bsc,dc->bsd", x_prev, conv_w[:, :, 0])
        + jnp.einsum("bsc,dc->bsd", x, conv_w[:, :, 1])
        + jnp.einsum("bsc,dc->bsd", x_next, conv_w[:, :, 2])
        + conv_b
    )
    return conv + pos_tab[None] + temp_emb


if __name__ == "__main__":
    B, S, C_IN, D_MODEL = 2, 8, 4, 128  # D lane-dense (128); S multiple of 8

    key = jax.random.PRNGKey(0)
    kw, kb, kx, k_mo, k_da, k_wd, k_hr = jax.random.split(key, 7)

    # Conv1d(c_in, d_model, k=3) params, kaiming-normal-ish (deterministic).
    fan_in = C_IN * 3
    gain = math.sqrt(2.0 / (1.0 + 0.01 ** 2))
    conv_w = jax.random.normal(kw, (D_MODEL, C_IN, 3), jnp.float32) * (gain / math.sqrt(fan_in))
    bound = 1.0 / math.sqrt(fan_in)
    conv_b = jax.random.uniform(kb, (D_MODEL,), jnp.float32, -bound, bound)

    # Inputs: x (B,S,C) float, x_mark (B,S,4) int indices [month, day, weekday, hour]
    x = jax.random.normal(kx, (B, S, C_IN), jnp.float32)
    month = jax.random.randint(k_mo, (B, S), 0, 13)
    day = jax.random.randint(k_da, (B, S), 0, 32)
    weekday = jax.random.randint(k_wd, (B, S), 0, 7)
    hour = jax.random.randint(k_hr, (B, S), 0, 24)
    x_mark = jnp.stack([month, day, weekday, hour], axis=-1).astype(jnp.int32)

    # Fixed (non-trainable) sinusoidal tables.
    pos_tab = sinusoid_table(5000, D_MODEL)[:S]                 # PositionalEmbedding.pe[:, :S]
    temp_tab, mark_offsets = build_temporal_table(D_MODEL)      # (128, D), offsets (4,)
    packed_ids = pack_mark_indices(x_mark, mark_offsets)        # (B, S, 1) int32

    out = data_embedding_forward(x, packed_ids, conv_w, conv_b, pos_tab, temp_tab)
    out = jax.block_until_ready(out)

    # Pure-JAX reference (temporal lookup done with plain gathers).
    month_tab = sinusoid_table(13, D_MODEL)
    day_tab = sinusoid_table(32, D_MODEL)
    weekday_tab = sinusoid_table(7, D_MODEL)
    hour_tab = sinusoid_table(24, D_MODEL)
    temp_emb = (
        hour_tab[x_mark[:, :, 3]]
        + weekday_tab[x_mark[:, :, 2]]
        + day_tab[x_mark[:, :, 1]]
        + month_tab[x_mark[:, :, 0]]
    )
    ref = ref_forward(x, conv_w, conv_b, pos_tab, temp_emb)
    np.testing.assert_allclose(np.asarray(out), np.asarray(ref), rtol=1e-4, atol=1e-4)

    print("KERNEL_OK")
</pallas_src>

<mosaic_0001>
module attributes {stable_mosaic.version = 11 : i64} {
  func.func @data_embedding_kernel(%arg0: i32, %arg1: memref<1x8x4xf32, #tpu.memory_space<vmem>>, %arg2: memref<1x8x1xi32, #tpu.memory_space<vmem>>, %arg3: memref<140x128xf32, #tpu.memory_space<vmem>>, %arg4: memref<8x128xf32, #tpu.memory_space<vmem>>, %arg5: memref<1x8x128xf32, #tpu.memory_space<vmem>>) attributes {dimension_semantics = [#tpu.dimension_semantics<parallel>], iteration_bounds = array<i64: 2>, scalar_prefetch = 0 : i64, scratch_operands = 0 : i64, tpu.core_type = #tpu.core_type<tc>, window_params = [{transform_indices = @transform_0, window_bounds = array<i64: 1, 8, 4>}, {transform_indices = @transform_1, window_bounds = array<i64: 1, 8, 1>}, {pipeline_mode = #tpu.pipeline_mode<synchronous>, transform_indices = @transform_2, window_bounds = array<i64: 140, 128>}, {pipeline_mode = #tpu.pipeline_mode<synchronous>, transform_indices = @transform_3, window_bounds = array<i64: 8, 128>}, {transform_indices = @transform_4, window_bounds = array<i64: 1, 8, 128>}]} {
    %c0 = arith.constant 0 : index
    %c0_0 = arith.constant 0 : index
    %c0_1 = arith.constant 0 : index
    %0 = vector.load %arg1[%c0, %c0_0, %c0_1] : memref<1x8x4xf32, #tpu.memory_space<vmem>>, vector<1x8x4xf32>
    %c1_i32 = arith.constant 1 : i32
    %1 = tpu.dynamic_rotate %0 by %c1_i32 dim 1 : vector<1x8x4xf32>, i32 -> vector<1x8x4xf32>
    %c7_i32 = arith.constant 7 : i32
    %2 = tpu.dynamic_rotate %0 by %c7_i32 dim 1 : vector<1x8x4xf32>, i32 -> vector<1x8x4xf32>
    %c0_2 = arith.constant 0 : index
    %c0_3 = arith.constant 0 : index
    %c0_4 = arith.constant 0 : index
    %3 = vector.load %arg2[%c0_2, %c0_3, %c0_4] : memref<1x8x1xi32, #tpu.memory_space<vmem>>, vector<1x8x1xi32>
    %4 = vector.shape_cast %3 : vector<1x8x1xi32> to vector<8x1xi32>
    %5 = tpu.iota {dimensions = array<i32: 1>} : vector<1x128xi32>
    %c255_i32 = arith.constant 255 : i32
    %6 = vector.broadcast %c255_i32 : i32 to vector<8x1xi32>
    %7 = arith.andi %4, %6 : vector<8x1xi32>
    %8 = vector.broadcast %7 : vector<8x1xi32> to vector<8x128xi32>
    %9 = vector.broadcast %5 : vector<1x128xi32> to vector<8x128xi32>
    %10 = arith.cmpi eq, %8, %9 : vector<8x128xi32>
    %c8_i32 = arith.constant 8 : i32
    %11 = vector.broadcast %c8_i32 : i32 to vector<8x1xi32>
    %12 = arith.shrsi %4, %11 : vector<8x1xi32>
    %c255_i32_5 = arith.constant 255 : i32
    %13 = vector.broadcast %c255_i32_5 : i32 to vector<8x1xi32>
    %14 = arith.andi %12, %13 : vector<8x1xi32>
    %15 = vector.broadcast %14 : vector<8x1xi32> to vector<8x128xi32>
    %16 = vector.broadcast %5 : vector<1x128xi32> to vector<8x128xi32>
    %17 = arith.cmpi eq, %15, %16 : vector<8x128xi32>
    %18 = arith.ori %10, %17 : vector<8x128xi1>
    %c16_i32 = arith.constant 16 : i32
    %19 = vector.broadcast %c16_i32 : i32 to vector<8x1xi32>
    %20 = arith.shrsi %4, %19 : vector<8x1xi32>
    %c255_i32_6 = arith.constant 255 : i32
    %21 = vector.broadcast %c255_i32_6 : i32 to vector<8x1xi32>
    %22 = arith.andi %20, %21 : vector<8x1xi32>
    %23 = vector.broadcast %22 : vector<8x1xi32> to vector<8x128xi32>
    %24 = vector.broadcast %5 : vector<1x128xi32> to vector<8x128xi32>
    %25 = arith.cmpi eq, %23, %24 : vector<8x128xi32>
    %26 = arith.ori %18, %25 : vector<8x128xi1>
    %c24_i32 = arith.constant 24 : i32
    %27 = vector.broadcast %c24_i32 : i32 to vector<8x1xi32>
    %28 = arith.shrsi %4, %27 : vector<8x1xi32>
    %c255_i32_7 = arith.constant 255 : i32
    %29 = vector.broadcast %c255_i32_7 : i32 to vector<8x1xi32>
    %30 = arith.andi %28, %29 : vector<8x1xi32>
    %31 = vector.broadcast %30 : vector<8x1xi32> to vector<8x128xi32>
    %32 = vector.broadcast %5 : vector<1x128xi32> to vector<8x128xi32>
    %33 = arith.cmpi eq, %31, %32 : vector<8x128xi32>
    %34 = arith.ori %26, %33 : vector<8x128xi1>
    %35 = arith.extui %34 : vector<8x128xi1> to vector<8x128xi32>
    %36 = arith.sitofp %35 : vector<8x128xi32> to vector<8x128xf32>
    %37 = vector.shape_cast %1 : vector<1x8x4xf32> to vector<8x4xf32>
    %38 = vector.shape_cast %0 : vector<1x8x4xf32> to vector<8x4xf32>
    %39 = vector.shape_cast %2 : vector<1x8x4xf32> to vector<8x4xf32>
    %40 = tpu.concatenate %36, %37, %38, %39 in 1 : vector<8x128xf32>, vector<8x4xf32>, vector<8x4xf32>, vector<8x4xf32> -> vector<8x140xf32>
    %c0_8 = arith.constant 0 : index
    %c0_9 = arith.constant 0 : index
    %41 = vector.load %arg3[%c0_8, %c0_9] : memref<140x128xf32, #tpu.memory_space<vmem>>, vector<140x128xf32>
    %cst = arith.constant dense<0.000000e+00> : vector<8x128xf32>
    %42 = tpu.matmul %40, %41, %cst {dimension_numbers = #tpu.dot_dimension_numbers<[1], [0], [0], [1], [0, 0, 1, 1], [], []>} : vector<8x140xf32>, vector<140x128xf32>, vector<8x128xf32> -> vector<8x128xf32>
    %43 = vector.shape_cast %42 : vector<8x128xf32> to vector<1x8x128xf32>
    %c0_10 = arith.constant 0 : index
    %c0_11 = arith.constant 0 : index
    %44 = vector.load %arg4[%c0_10, %c0_11] : memref<8x128xf32, #tpu.memory_space<vmem>>, vector<8x128xf32>
    %45 = vector.shape_cast %44 : vector<8x128xf32> to vector<1x8x128xf32>
    %46 = arith.addf %43, %45 : vector<1x8x128xf32>
    %c0_12 = arith.constant 0 : index
    %c0_13 = arith.constant 0 : index
    %c0_14 = arith.constant 0 : index
    %47 = vector.load %arg5[%c0_12, %c0_13, %c0_14] : memref<1x8x128xf32, #tpu.memory_space<vmem>>, vector<1x8x128xf32>
    tpu.vector_store %arg5[%c0_12, %c0_13, %c0_14], %46 {strides = array<i32>} : memref<1x8x128xf32, #tpu.memory_space<vmem>>, vector<1x8x128xf32>,
    return
  }
  func.func @transform_0(%arg0: i32) -> (i32, i32, i32) {
    %c0_i32 = arith.constant 0 : i32
    %c0_i32_0 = arith.constant 0 : i32
    %c0_i32_1 = arith.constant 0 : i32
    return %arg0, %c0_i32, %c0_i32_0 : i32, i32, i32
  }
  func.func @transform_1(%arg0: i32) -> (i32, i32, i32) {
    %c0_i32 = arith.constant 0 : i32
    %c0_i32_0 = arith.constant 0 : i32
    %c0_i32_1 = arith.constant 0 : i32
    return %arg0, %c0_i32, %c0_i32_0 : i32, i32, i32
  }
  func.func @transform_2(%arg0: i32) -> (i32, i32) {
    %c0_i32 = arith.constant 0 : i32
    %c0_i32_0 = arith.constant 0 : i32
    %c0_i32_1 = arith.constant 0 : i32
    return %c0_i32, %c0_i32_0 : i32, i32
  }
  func.func @transform_3(%arg0: i32) -> (i32, i32) {
    %c0_i32 = arith.constant 0 : i32
    %c0_i32_0 = arith.constant 0 : i32
    %c0_i32_1 = arith.constant 0 : i32
    return %c0_i32, %c0_i32_0 : i32, i32
  }
  func.func @transform_4(%arg0: i32) -> (i32, i32, i32) {
    %c0_i32 = arith.constant 0 : i32
    %c0_i32_0 = arith.constant 0 : i32
    %c0_i32_1 = arith.constant 0 : i32
    return %arg0, %c0_i32, %c0_i32_0 : i32, i32, i32
  }
}

</mosaic_0001>

<llo_original>
// kernel: tpu_custom_call.1
$region0: #{tpu_custom_call.1}
  #allocation0 [shape = 'u32[]', space=smem, size = 0x4, offset = 0x4, fixed_abs, tag = 'smem constant byte address 0x4 - core index']
  #allocation1 [shape = 'u32[144,128]{1,0:T(1,128)}', space=vmem, size = 0x12000, scoped, tag = 'internal scratch']
  %s0 = inlined_call_operand.vmem [shape: f32[2,8,4], index: 0, kind: input, shape index: {}]
  %s1 = inlined_call_operand.vmem [shape: s32[2,8,1], index: 1, kind: input, shape index: {}]
  %s2 = inlined_call_operand.hbm [shape: f32[140,128], index: 2, kind: input, shape index: {}]
  %s3 = inlined_call_operand.vmem [shape: f32[8,128], index: 3, kind: input, shape index: {}]
  %s4 = inlined_call_operand.hbm [shape: f32[2,8,128], index: 4, kind: output, shape index: {}]
  %s5 = sld [smem:[#allocation0]]
  $region53: #{tpu_custom_call.1} parent=0
    _
  %s7 = ssub.s32 1, %s5
  %s8 = scalar_select 0, %s7, %s5
  $region1: #{tpu_custom_call.1} parent=0
    #allocation2 [shape = 'u8[73728]{0}', space=vmem, size = 0x12000, scoped, tag = 'input window, operand 2, single buffered']
    #allocation3 [shape = 's32[2]{0}', space=sflag, size = 0x8, scoped, tag = 'scoped memory for tpu_custom_call.1']
    #allocation4 [shape = 's32[2]{0}', space=sflag, size = 0x8, scoped, tag = 'scoped memory for tpu_custom_call.1']
    #allocation5 [shape = 'u8[8192]{0}', space=vmem, size = 0x2000, scoped, tag = 'output window, operand 0']
    %9 = vsyncpa [#allocation3], 0
    %10 = vsyncpa [#allocation4], 0
    %s11 = scalar_lea.sflag [#allocation4], 1
    %12 = vsyncpa %s11, 0
    loop: start=0, step=1, limit=4
    $region2: #{tpu_custom_call.1} parent=1 // loop_pre_header
      _
    $region3: #{tpu_custom_call.1} parent=1 // loop_header
      %s14 = sphi 0, %s18
      %p15 = scmp.ge.s32.totalorder %s14, 4
      %s24 = sphi 0, %s26
      %s27 = sphi 0, %s24
      %s28 = sphi 0, %s27
      %s44 = sphi 0, %s28
      %s50 = sphi 0, %s52
      %s53 = sphi 0, %s50
      %s54 = sphi 0, %s53
      %s70 = sphi 0, %s54
      %s74 = sphi 0, %s74
      %s76 = sphi 0, %s74
      %s77 = sphi 0, %s76
      %s91 = sphi 0, %s77
      %s95 = sphi 0, %s95
      %s97 = sphi 0, %s95
      %s98 = sphi 0, %s97
      %s112 = sphi 0, %s98
      %s118 = sphi 0, %s120
      %s121 = sphi 0, %s118
      %s122 = sphi 0, %s121
      %s138 = sphi 0, %s122
    $region4: #{tpu_custom_call.1} parent=1 // loop_header_branch
      %17 = sbr.rel (%p15) target = $region8
    $region5: #{tpu_custom_call.1} parent=1 // loop_body
      %s19 = ssub.s32 %s14, 1
      %s20 = ssub.s32 %s14, 2
      %s21 = sadd.s32 %s14, 1
      %s22 = ssub.s32 %s14, %s21
      %p23 = scmp.eq.s32.totalorder %s22, 0
      %s25 = sadd.s32 %s24, 1
      %s26 = scalar_select %p23, %s24, %s25
      %p29 = pneg %p23
      %p30 = scmp.eq.s32.totalorder %s14, 1
      %p31 = por %p29, %p30
      %p32 = scmp.ne.s32.totalorder %s24, %s27
      %p33 = scmp.eq.s32.totalorder %s14, 0
      %p34 = por %p32, %p33
      %p35 = scmp.ne.s32.totalorder %s24, %s27
      %p36 = scmp.eq.s32.totalorder %s19, 1
      %p37 = por %p35, %p36
      %p38 = scmp.ne.s32.totalorder %s27, %s28
      %p39 = scmp.eq.s32.totalorder %s19, 0
      %p40 = por %p38, %p39
      %p41 = scmp.ne.s32.totalorder %s27, %s28
      %p42 = scmp.eq.s32.totalorder %s20, 1
      %p43 = por %p41, %p42
      %p45 = scmp.ne.s32.totalorder %s28, %s44
      %p46 = scmp.eq.s32.totalorder %s20, 0
      %p47 = por %p45, %p46
      %s48 = ssub.s32 %s14, %s21
      %p49 = scmp.eq.s32.totalorder %s48, 0
      %s51 = sadd.s32 %s50, 1
      %s52 = scalar_select %p49, %s50, %s51
      %p55 = pneg %p49
      %p56 = scmp.eq.s32.totalorder %s14, 1
      %p57 = por %p55, %p56
      %p58 = scmp.ne.s32.totalorder %s50, %s53
      %p59 = scmp.eq.s32.totalorder %s14, 0
      %p60 = por %p58, %p59
      %p61 = scmp.ne.s32.totalorder %s50, %s53
      %p62 = scmp.eq.s32.totalorder %s19, 1
      %p63 = por %p61, %p62
      %p64 = scmp.ne.s32.totalorder %s53, %s54
      %p65 = scmp.eq.s32.totalorder %s19, 0
      %p66 = por %p64, %p65
      %p67 = scmp.ne.s32.totalorder %s53, %s54
      %p68 = scmp.eq.s32.totalorder %s20, 1
      %p69 = por %p67, %p68
      %p71 = scmp.ne.s32.totalorder %s54, %s70
      %p72 = scmp.eq.s32.totalorder %s20, 0
      %p73 = por %p71, %p72
      %s75 = sadd.s32 %s74, 1
      %p78 = scmp.eq.s32.totalorder %s14, 1
      %p79 = scmp.ne.s32.totalorder %s74, %s76
      %p80 = scmp.eq.s32.totalorder %s14, 0
      %p81 = por %p79, %p80
      %p82 = scmp.ne.s32.totalorder %s74, %s76
      %p83 = scmp.eq.s32.totalorder %s19, 1
      %p84 = por %p82, %p83
      %p85 = scmp.ne.s32.totalorder %s76, %s77
      %p86 = scmp.eq.s32.totalorder %s19, 0
      %p87 = por %p85, %p86
      %p88 = scmp.ne.s32.totalorder %s76, %s77
      %p89 = scmp.eq.s32.totalorder %s20, 1
      %p90 = por %p88, %p89
      %p92 = scmp.ne.s32.totalorder %s77, %s91
      %p93 = scmp.eq.s32.totalorder %s20, 0
      %p94 = por %p92, %p93
      %s96 = sadd.s32 %s95, 1
      %p99 = scmp.eq.s32.totalorder %s14, 1
      %p100 = scmp.ne.s32.totalorder %s95, %s97
      %p101 = scmp.eq.s32.totalorder %s14, 0
      %p102 = por %p100, %p101
      %p103 = scmp.ne.s32.totalorder %s95, %s97
      %p104 = scmp.eq.s32.totalorder %s19, 1
      %p105 = por %p103, %p104
      %p106 = scmp.ne.s32.totalorder %s97, %s98
      %p107 = scmp.eq.s32.totalorder %s19, 0
      %p108 = por %p106, %p107
      %p109 = scmp.ne.s32.totalorder %s97, %s98
      %p110 = scmp.eq.s32.totalorder %s20, 1
      %p111 = por %p109, %p110
      %p113 = scmp.ne.s32.totalorder %s98, %s112
      %p114 = scmp.eq.s32.totalorder %s20, 0
      %p115 = por %p113, %p114
      %s116 = ssub.s32 %s14, %s21
      %p117 = scmp.eq.s32.totalorder %s116, 0
      %s119 = sadd.s32 %s118, 1
      %s120 = scalar_select %p117, %s118, %s119
      %p123 = pneg %p117
      %p124 = scmp.eq.s32.totalorder %s14, 1
      %p125 = por %p123, %p124
      %p126 = scmp.ne.s32.totalorder %s118, %s121
      %p127 = scmp.eq.s32.totalorder %s14, 0
      %p128 = por %p126, %p127
      %p129 = scmp.ne.s32.totalorder %s118, %s121
      %p130 = scmp.eq.s32.totalorder %s19, 1
      %p131 = por %p129, %p130
      %p132 = scmp.ne.s32.totalorder %s121, %s122
      %p133 = scmp.eq.s32.totalorder %s19, 0
      %p134 = por %p132, %p133
      %p135 = scmp.ne.s32.totalorder %s121, %s122
      %p136 = scmp.eq.s32.totalorder %s20, 1
      %p137 = por %p135, %p136
      %p139 = scmp.ne.s32.totalorder %s122, %s138
      %p140 = scmp.eq.s32.totalorder %s20, 0
      %p141 = por %p139, %p140
      %p142 = scmp.le.s32.totalorder 1, %s14
      %p143 = scmp.lt.s32.totalorder %s14, 3
      %p144 = pnand %p142, %p143
      %p145 = pneg %p144
      // Predicated region
      $region9: #{tpu_custom_call.1} parent=5 // pred_check
        _
      $region10: #{tpu_custom_call.1} parent=5 // pred_check_branch
        %147 = sbr.rel (%p144) target = $region12
      $region11: #{tpu_custom_call.1} parent=5 // pred_region
        %s148 = ssub.s32 %s14, 1
        // Predicated region
        $region13: #{tpu_custom_call.1} parent=11 // pred_check
          %p149 = pneg %p87
        $region14: #{tpu_custom_call.1} parent=11 // pred_check_branch
          %151 = sbr.rel (%p149) target = $region16
        $region15: #{tpu_custom_call.1} parent=11 // pred_region
          %s153 = ssub.s32 2304, 2304
          %154 = vsyncadd [#allocation3], %s153
          %s155 = sshll.u32 [#allocation2], 4
          %s156 = int_to_ptr.vmem [resolvable:$true] %s155
          %161 = dma.hbm_to_vmem [thread:$0]  %s2, 2304, %s156, [#allocation3], 128, 128, 8
        $region16: #{tpu_custom_call.1} parent=11 // pred_fallthru
          _
        // Predicated region
        $region17: #{tpu_custom_call.1} parent=11 // pred_check
          %p162 = pneg %p108
        $region18: #{tpu_custom_call.1} parent=11 // pred_check_branch
          %164 = sbr.rel (%p162) target = $region20
        $region19: #{tpu_custom_call.1} parent=11 // pred_region
          _
        $region20: #{tpu_custom_call.1} parent=11 // pred_fallthru
          _
      $region12: #{tpu_custom_call.1} parent=5 // pred_fallthru
        _
      %p165 = scmp.lt.s32.totalorder %s14, 2
      // Predicated region
      $region21: #{tpu_custom_call.1} parent=5 // pred_check
        %p166 = pneg %p165
      $region22: #{tpu_custom_call.1} parent=5 // pred_check_branch
        %168 = sbr.rel (%p166) target = $region24
      $region23: #{tpu_custom_call.1} parent=5 // pred_region
        // Predicated region
        $region25: #{tpu_custom_call.1} parent=23 // pred_check
          %p169 = pneg %p34
        $region26: #{tpu_custom_call.1} parent=23 // pred_check_branch
          %171 = sbr.rel (%p169) target = $region28
        $region27: #{tpu_custom_call.1} parent=23 // pred_region
          %p172 = scmp.lt.s32.totalorder %s14, 1
          %s173 = scalar_select %p172, %s14, 1
          %s174 = smul.addr %s173, 8
          %s175 = scalar_lea.vmem %s0, %s174
        $region28: #{tpu_custom_call.1} parent=23 // pred_fallthru
          _
        // Predicated region
        $region29: #{tpu_custom_call.1} parent=23 // pred_check
          %p176 = pneg %p60
        $region30: #{tpu_custom_call.1} parent=23 // pred_check_branch
          %178 = sbr.rel (%p176) target = $region32
        $region31: #{tpu_custom_call.1} parent=23 // pred_region
          %p179 = scmp.lt.s32.totalorder %s14, 1
          %s180 = scalar_select %p179, %s14, 1
          %s181 = smul.addr %s180, 8
          %s182 = scalar_lea.vmem %s1, %s181
        $region32: #{tpu_custom_call.1} parent=23 // pred_fallthru
          _
      $region24: #{tpu_custom_call.1} parent=5 // pred_fallthru
        _
      %p183 = scmp.le.s32.totalorder 1, %s14
      %p184 = scmp.lt.s32.totalorder %s14, 3
      %p185 = pnand %p183, %p184
      %p186 = pneg %p185
      // Predicated region
      $region33: #{tpu_custom_call.1} parent=5 // pred_check
        _
      $region34: #{tpu_custom_call.1} parent=5 // pred_check_branch
        %188 = sbr.rel (%p185) target = $region36
      $region35: #{tpu_custom_call.1} parent=5 // pred_region
        %s189 = ssub.s32 %s14, 1
        // Predicated region
        $region37: #{tpu_custom_call.1} parent=35 // pred_check
          %p190 = pneg %p87
        $region38: #{tpu_custom_call.1} parent=35 // pred_check_branch
          %192 = sbr.rel (%p190) target = $region40
        $region39: #{tpu_custom_call.1} parent=35 // pred_region
          %193 = dma.done [#allocation3], 2304
        $region40: #{tpu_custom_call.1} parent=35 // pred_fallthru
          _
        %p194 = scmp.lt.s32.totalorder %s19, 1
        %s195 = scalar_select %p194, %s19, 1
        %s196 = smul.addr %s195, 8
        %s197 = scalar_lea.vmem %s0, %s196
        %p198 = pneg %p40
        %p199 = pneg %p37
        %p200 = scmp.lt.s32.totalorder %s19, 1
        %s201 = scalar_select %p200, %s19, 1
        %s202 = smul.addr %s201, 8
        %s203 = scalar_lea.vmem %s1, %s202
        %p204 = pneg %p66
        %p205 = pneg %p63
        %p206 = pneg %p87
        %p207 = pneg %p84
        %p208 = pneg %p108
        %p209 = pneg %p105
        %p210 = pneg %p134
        %p211 = pneg %p131
        %s212 = sand.u32 %s121, 1
        %s213 = scalar_lea.sflag [#allocation4], %s212
        %s214 = sand.u32 %s121, 1
        %s215 = smul.addr %s214, 8
        %s216 = scalar_lea.vmem [#allocation5], %s215
        %p217 = scmp.lt.s32.totalorder %s19, 1
        %s218 = scalar_select %p217, %s19, 1
        %s219 = smul.addr %s218, 8
        %s220 = scalar_lea.vmem %s0, %s219
        %p221 = scmp.lt.s32.totalorder %s19, 1
        %s222 = scalar_select %p221, %s19, 1
        %s223 = smul.addr %s222, 8
        %s224 = scalar_lea.vmem %s1, %s223
        %v225 = vld [vmem:[%s220] sm:$0xff]
        %v226 = vrot.slane %v225, 7
        %v227 = vrot.slane %v225, 1
        %v228 = vld [vmem:[%s224] sm:$0xff]
        %v229 = vlaneseq
        %v230 = vand.u32 %v229, 127
        %v231 = vand.u32 %v228, 255
        %232 = vset.pattern.permute.xlu0 0
        %233 = vperm.xlu0 %232, %v231
        %v234 = vpop.permute.xlu0 %233
        %vm235 = vcmp.eq.s32.totalorder %v234, %v230
        %v236 = vshra.s32 %v228, 8
        %v237 = vand.u32 %v236, 255
        %238 = vset.pattern.permute.xlu0 0
        %239 = vperm.xlu0 %238, %v237
        %v240 = vpop.permute.xlu0 %239
        %vm241 = vcmp.eq.s32.totalorder %v240, %v230
        %vm242 = vmor %vm235, %vm241
        %v243 = vshra.s32 %v228, 16
        %v244 = vand.u32 %v243, 255
        %245 = vset.pattern.permute.xlu0 0
        %246 = vperm.xlu0 %245, %v244
        %v247 = vpop.permute.xlu0 %246
        %vm248 = vcmp.eq.s32.totalorder %v247, %v230
        %vm249 = vmor %vm242, %vm248
        %v250 = vshra.s32 %v228, 24
        %v251 = vand.u32 %v250, 255
        %252 = vset.pattern.permute.xlu0 0
        %253 = vperm.xlu0 %252, %v251
        %v254 = vpop.permute.xlu0 %253
        %vm255 = vcmp.eq.s32.totalorder %v254, %v230
        %vm256 = vmor %vm249, %vm255
        %v257 = vsel %vm256, 1, 0
        %v258 = vcvt.s32.f32 %v257
        %260 = vrot.lane.b32.xlu0 %v225, 4
        %v261 = vpop.permute.xlu0 %260
        %264 = vrot.lane.b32.xlu0 %v227, 8
        %v265 = vpop.permute.xlu0 %264
        %vm267 = vcmask 31744
        %v268 = vsel %vm267, %v226, %v261
        %vm269 = vcmask 64512
        %v270 = vsel %vm269, %v268, %v265
        %v271 = vld [vmem:[#allocation2] sm:$0xff]
        %v272 = vld [vmem:[#allocation2 + $0x8] sm:$0xff]
        %v273 = vld [vmem:[#allocation2 + $0x10] sm:$0xff]
        %v274 = vld [vmem:[#allocation2 + $0x18] sm:$0xff]
        %v275 = vld [vmem:[#allocation2 + $0x20] sm:$0xff]
        %v276 = vld [vmem:[#allocation2 + $0x28] sm:$0xff]
        %v277 = vld [vmem:[#allocation2 + $0x30] sm:$0xff]
        %v278 = vld [vmem:[#allocation2 + $0x38] sm:$0xff]
        %v279 = vld [vmem:[#allocation2 + $0x40] sm:$0xff]
        %v280 = vld [vmem:[#allocation2 + $0x48] sm:$0xff]
        %v281 = vld [vmem:[#allocation2 + $0x50] sm:$0xff]
        %v282 = vld [vmem:[#allocation2 + $0x58] sm:$0xff]
        %v283 = vld [vmem:[#allocation2 + $0x60] sm:$0xff]
        %v284 = vld [vmem:[#allocation2 + $0x68] sm:$0xff]
        %v285 = vld [vmem:[#allocation2 + $0x70] sm:$0xff]
        %v286 = vld [vmem:[#allocation2 + $0x78] sm:$0xff]
        %v287 = vld [vmem:[#allocation2 + $0x80] sm:$0xff]
        %v288 = vld [vmem:[#allocation2 + $0x88] sm:$0xf]
        %vm289 = vcmask 97280
        %v291 = vsel %vm289, %v270, 0
        %vm293 = vcmask 1043456
        %v295 = vsel %vm293, %v288, 0
        %297 = vmatprep.subr.mxu0 0.0
        %298 = vmatpush1.msra.mxu0 %v286
        %299 = vmatprep.subr.mxu0 0.0
        %300 = vmatpush1.msra.mxu0 %v285
        %301 = vmatprep.subr.mxu0 0.0
        %302 = vmatpush1.msra.mxu0 %v284
        %303 = vmatprep.subr.mxu0 0.0
        %304 = vmatpush1.msra.mxu0 %v283
        %305 = vmatprep.subr.mxu0 0.0
        %306 = vmatpush1.msra.mxu0 %v282
        %307 = vmatprep.subr.mxu0 0.0
        %308 = vmatpush1.msra.mxu0 %v281
        %309 = vmatprep.subr.mxu0 0.0
        %310 = vmatpush1.msra.mxu0 %v280
        %311 = vmatprep.subr.mxu0 0.0
        %312 = vmatpush1.msra.mxu0 %v279
        %313 = vmatprep.subr.mxu0 0.0
        %314 = vmatpush1.msra.mxu0 %v278
        %315 = vmatprep.subr.mxu0 0.0
        %316 = vmatpush1.msra.mxu0 %v277
        %317 = vmatprep.subr.mxu0 0.0
        %318 = vmatpush1.msra.mxu0 %v276
        %319 = vmatprep.subr.mxu0 0.0
        %320 = vmatpush1.msra.mxu0 %v275
        %321 = vmatprep.subr.mxu0 0.0
        %322 = vmatpush1.msra.mxu0 %v274
        %323 = vmatprep.subr.mxu0 0.0
        %324 = vmatpush1.msra.mxu0 %v273
        %325 = vmatprep.subr.mxu0 0.0
        %326 = vmatpush1.msra.mxu0 %v272
        %327 = vmatprep.subr.mxu0 0.0
        %328 = vmatpush1.msra.mxu0 %v271
        %329 = vmatprep.subr.mxu0 0.0
        %330 = vmatpush2.msra.mxu0 0.0
        %331 = vmatprep.subr.mxu0 0.0
        %332 = vmatpush2.msra.mxu0 0.0
        %333 = vmatprep.subr.mxu0 0.0
        %334 = vmatpush2.msra.mxu0 0.0
        %335 = vmatprep.subr.mxu0 0.0
        %336 = vmatpush2.msra.mxu0 0.0
        %337 = vmatprep.subr.mxu0 0.0
        %338 = vmatpush2.msra.mxu0 0.0
        %339 = vmatprep.subr.mxu0 0.0
        %340 = vmatpush2.msra.mxu0 0.0
        %341 = vmatprep.subr.mxu0 0.0
        %342 = vmatpush2.msra.mxu0 0.0
        %343 = vmatprep.subr.mxu0 0.0
        %344 = vmatpush2.msra.mxu0 0.0
        %345 = vmatprep.subr.mxu0 0.0
        %346 = vmatpush2.msra.mxu0 0.0
        %347 = vmatprep.subr.mxu0 0.0
        %348 = vmatpush2.msra.mxu0 0.0
        %349 = vmatprep.subr.mxu0 0.0
        %350 = vmatpush2.msra.mxu0 0.0
        %351 = vmatprep.subr.mxu0 0.0
        %352 = vmatpush2.msra.mxu0 0.0
        %353 = vmatprep.subr.mxu0 0.0
        %354 = vmatpush2.msra.mxu0 0.0
        %355 = vmatprep.subr.mxu0 0.0
        %356 = vmatpush2.msra.mxu0 0.0
        %357 = vmatprep.subr.mxu0 0.0
        %358 = vmatpush2.msra.mxu0 %v295
        %359 = vmatprep.subr.mxu0 0.0
        %360 = vmatpush2.msra.mxu0 %v287
        %361 = vmatprep.mubr.f32.mxu0 %v291
        %362 = vmatmul.mubr.f32.gmra.mxu0 %v258
        %v363 = vpop.f32.mrf.mxu0
        %v364 = vadd.f32 0.0, %v363
        %v365 = vpop.f32.mrf.mxu0
        %366 = vdwg.mxu0
        %v367 = vld [vmem:[%s3] sm:$0xff]
        %v368 = vadd.f32 %v364, %v367
        %369 = vst [vmem:[%s216] sm:$0xff] %v368
        %s370 = sand.u32 %s121, 1
        %s371 = scalar_lea.sflag [#allocation4], %s370
        %s372 = sand.u32 %s121, 1
        %s373 = smul.addr %s372, 8
        %s374 = scalar_lea.vmem [#allocation5], %s373
        // Predicated region
        $region41: #{tpu_custom_call.1} parent=35 // pred_check
          %p375 = pneg %p131
        $region42: #{tpu_custom_call.1} parent=35 // pred_check_branch
          %377 = sbr.rel (%p375) target = $region44
        $region43: #{tpu_custom_call.1} parent=35 // pred_region
          %s379 = ssub.s32 128, 128
          %380 = vsyncadd %s371, %s379
          %s381 = smul.addr %s19, 128
          %s382 = scalar_lea.hbm %s4, %s381
          %s384 = sshll.u32 %s374, 4
          %s385 = int_to_ptr.vmem [resolvable:$true] %s384
          %387 = dma.vmem_to_hbm [thread:$0]  %s385, 128, %s382, %s371
        $region44: #{tpu_custom_call.1} parent=35 // pred_fallthru
          _
      $region36: #{tpu_custom_call.1} parent=5 // pred_fallthru
        _
      %p388 = scmp.le.s32.totalorder 2, %s14
      // Predicated region
      $region45: #{tpu_custom_call.1} parent=5 // pred_check
        %p389 = pneg %p388
      $region46: #{tpu_custom_call.1} parent=5 // pred_check_branch
        %391 = sbr.rel (%p389) target = $region48
      $region47: #{tpu_custom_call.1} parent=5 // pred_region
        %s392 = ssub.s32 %s14, 2
        // Predicated region
        $region49: #{tpu_custom_call.1} parent=47 // pred_check
          %p393 = pneg %p137
        $region50: #{tpu_custom_call.1} parent=47 // pred_check_branch
          %395 = sbr.rel (%p393) target = $region52
        $region51: #{tpu_custom_call.1} parent=47 // pred_region
          %s396 = sand.u32 %s122, 1
          %s397 = scalar_lea.sflag [#allocation4], %s396
          %s398 = sand.u32 %s122, 1
          %s399 = smul.addr %s398, 8
          %s400 = scalar_lea.vmem [#allocation5], %s399
          %401 = dma.done %s397, 128
        $region52: #{tpu_custom_call.1} parent=47 // pred_fallthru
          _
      $region48: #{tpu_custom_call.1} parent=5 // pred_fallthru
        _
    $region6: #{tpu_custom_call.1} parent=1 // loop_footer
      %s18 = sadd.s32 1, %s14
    $region7: #{tpu_custom_call.1} parent=1 // loop_footer_branch
      %13 = sbr.rel target = $region3
    $region8: #{tpu_custom_call.1} parent=1 // loop_exit
      _
    %402 = vsyncpa [#allocation3], 1
    %s403 = scalar_lea.sflag [#allocation3], 1
    %404 = vsyncpa %s403, 1
    %405 = vsyncpa [#allocation4], 1
    %s406 = scalar_lea.sflag [#allocation4], 1
    %407 = vsyncpa %s406, 1

</llo_original>
